<compile_context>
chip_gen: v7x
topology: tpu7x:2x2x1
jax: 0.10.0
libtpu: 0.0.40
codegen_flags: <defaults>
</compile_context>

<pallas_src>
import functools
import math

import jax
import jax.numpy as jnp
from jax import lax
from jax.experimental import pallas as pl
from jax.experimental.pallas import tpu as pltpu


def _round_up(x, m):
    return ((x + m - 1) // m) * m


def _cdiv(a, b):
    return -(-a // b)


def _physical_vmem_bytes():
    """Physical per-core VMEM; falls back to the v7x value (safe everywhere)."""
    try:
        return int(pltpu.get_tpu_info().vmem_capacity_bytes)
    except Exception:
        return 64 << 20


# ---------------- Pallas kernel ----------------

def _ls_xent_kernel(x_ref, w_ref, b_ref, tgt_ref, slog_ref, out_ref, stats_ref,
                    *, confidence, smoothing_value, ent_const, ignore_index,
                    vocab_size, tile_vocab):
    """Grid step (i, j): row tile i  x  vocab tile j.

    x_ref    : (TM, H)   bf16  decoder output rows (resident across j)
    w_ref    : (H,  TKV) bf16  generator weight tile (streamed over j)
    b_ref    : (1,  TKV) f32   generator bias tile (-1e30 on padded columns)
    tgt_ref  : (TM, 1)   i32   target ids (resident across j)
    slog_ref : (TM, 1)   f32   precomputed sum_v logits[:, v] (real vocab only)
    out_ref  : (TM, 1)   f32   per-row loss, written at the last vocab tile
    stats_ref: (TM, 4)   f32   col 0: running max, 1: running sum-exp,
                               2: target logit, 3: padding-column logit
    """
    j = pl.program_id(1)

    @pl.when(j == 0)
    def _init():
        lane = lax.broadcasted_iota(jnp.int32, stats_ref.shape, 1)
        stats_ref[...] = jnp.where(lane == 0, jnp.float32(-1e30),
                                   jnp.float32(0.0))

    # Generator linear for this vocab tile: bf16 MXU matmul, f32 accumulate.
    # Padded vocab columns have zero weight and -1e30 bias -> logits = -1e30,
    # so they contribute exp(...)=0 to the LSE with no per-step mask.
    logits = jnp.dot(x_ref[...], w_ref[...],
                     preferred_element_type=jnp.float32) + b_ref[...]

    # Online log-sum-exp across vocab tiles.
    m_prev = stats_ref[:, 0:1]
    m_new = jnp.maximum(m_prev, jnp.max(logits, axis=-1, keepdims=True))
    l_new = (stats_ref[:, 1:2] * jnp.exp(m_prev - m_new)
             + jnp.sum(jnp.exp(logits - m_new), axis=-1, keepdims=True))
    stats_ref[:, 0:1] = m_new
    stats_ref[:, 1:2] = l_new

    # Target logit: the target hits exactly one column of one vocab tile
    # (targets are always < real vocab, never a padded column).
    col = j * tile_vocab + lax.broadcasted_iota(jnp.int32, logits.shape, 1)
    tgt = tgt_ref[...]
    stats_ref[:, 2:3] += jnp.sum(jnp.where(col == tgt, logits, 0.0),
                                 axis=-1, keepdims=True)

    # Padding-column logit: static column -> static slice inside its tile.
    @pl.when(j == ignore_index // tile_vocab)
    def _pad_col():
        p = ignore_index % tile_vocab
        stats_ref[:, 3:4] += logits[:, p:p + 1]

    @pl.when(j == pl.num_programs(1) - 1)
    def _finalize():
        lse = stats_ref[:, 0:1] + jnp.log(stats_ref[:, 1:2])
        lp_tgt = stats_ref[:, 2:3] - lse
        lp_pad = stats_ref[:, 3:4] - lse
        sum_lp = slog_ref[...] - jnp.float32(vocab_size) * lse
        # Closed-form KL(model_prob || softmax(logits)) for the smoothed label:
        #   conf*log(conf) + (V-2)*sv*log(sv) - conf*lp[tgt]
        #   - sv*(sum_v lp[v] - lp[pad] - lp[tgt])
        row_kl = (ent_const
                  - confidence * lp_tgt
                  - smoothing_value * (sum_lp - lp_pad - lp_tgt))
        out_ref[...] = jnp.where(tgt == ignore_index, 0.0, row_kl)


# ---------------- pallas_call wrapper ----------------

def label_smoothing_loss_sum(output_bottled, weight, bias, flat_tgt, *,
                             label_smoothing, ignore_index,
                             tile_rows=1024, tile_vocab=2048,
                             matmul_dtype=jnp.bfloat16):
    """Un-normalized label-smoothing KL loss (scalar, 'sum' reduction)."""
    n_rows, hidden = output_bottled.shape
    vocab = weight.shape[1]
    assert vocab > 2 and 0.0 < label_smoothing <= 1.0
    assert 0 <= ignore_index < vocab

    bpe = jnp.dtype(matmul_dtype).itemsize
    lane = 128

    # ---- VMEM budget: physical capacity minus Mosaic headroom ------------
    vmem_cap = _physical_vmem_bytes()                   # 64 MiB v7x, 128 MiB v5e/v6e
    vmem_budget = max(min(vmem_cap - (12 << 20), 110 << 20), 24 << 20)
    slack = 4 << 20

    def tile_bytes(tm, tkv):
        return (2 * tm * hidden * bpe          # x tile (double-buffered)
                + 2 * hidden * tkv * bpe       # W tile (double-buffered)
                + 2 * 8 * tkv * 4              # bias tile (sublane-padded)
                + 3 * 2 * tm * lane * 4        # tgt / slog / out (lane-padded)
                + tm * lane * 4                # stats scratch (lane-padded)
                + 3 * tm * tkv * 4)            # live (TM,TKV) f32 temporaries

    def tkv_cap_for(tm):
        fixed = (2 * tm * hidden * bpe + 3 * 2 * tm * lane * 4
                 + tm * lane * 4 + slack)
        per_col = 2 * hidden * bpe + 2 * 8 * 4 + 3 * tm * 4
        return ((vmem_budget - fixed) // per_col) // 128 * 128

    # ---- row tiling: as big as VMEM allows (arithmetic intensity is exactly
    # TM flops per streamed weight byte), balanced so padding stays small ----
    req_rows = int(tile_rows)
    while True:
        tm_desired = max(8, min(_round_up(req_rows, 8), _round_up(n_rows, 8)))
        n_row_tiles = _cdiv(n_rows, tm_desired)
        tm = _round_up(_cdiv(n_rows, n_row_tiles), 8)
        cap = tkv_cap_for(tm)
        if cap >= 128 or tm <= 8:
            break
        req_rows = max(8, tm // 2)
    n_rows_pad = tm * n_row_tiles
    # TODO(synk): on v7x (2 TensorCores) a caller whose batch fits one row tile
    # can pass a smaller tile_rows so the "parallel" row axis shards across cores.

    tkv = min(_round_up(int(tile_vocab), 128), max(cap, 128),
              _round_up(vocab, 128))
    vocab_pad = _round_up(vocab, tkv)
    n_vocab_tiles = vocab_pad // tkv

    # ---- pad & cast operands ----------------------------------------------
    x = output_bottled.astype(matmul_dtype)
    if n_rows_pad != n_rows:
        x = jnp.pad(x, ((0, n_rows_pad - n_rows), (0, 0)))
    w = weight.astype(matmul_dtype)
    b = bias.reshape(1, vocab).astype(jnp.float32)

    # Per-row sum of logits over the REAL vocab, hoisted out of the kernel:
    #   sum_v (x @ W + b)[:, v]  ==  x @ W.sum(1) + b.sum()     (tiny matvec)
    w_colsum = jnp.sum(w.astype(jnp.float32), axis=1)            # (H,)
    bias_sum = jnp.sum(b)
    slog = (x.astype(jnp.float32) @ w_colsum + bias_sum).reshape(n_rows_pad, 1)

    if vocab_pad != vocab:
        # Zero weight + -1e30 bias => padded logits are -1e30 and vanish from
        # the log-sum-exp; no per-step vocab mask needed inside the kernel.
        w = jnp.pad(w, ((0, 0), (0, vocab_pad - vocab)))
        b = jnp.pad(b, ((0, 0), (0, vocab_pad - vocab)), constant_values=-1e30)

    tgt = flat_tgt.reshape(-1).astype(jnp.int32)
    if n_rows_pad != n_rows:
        # Padded rows use ignore_index targets -> exactly zero loss.
        tgt = jnp.pad(tgt, (0, n_rows_pad - n_rows),
                      constant_values=ignore_index)
    tgt = tgt.reshape(n_rows_pad, 1)

    # ---- static label-smoothing constants ---------------------------------
    confidence = 1.0 - label_smoothing
    smoothing_value = label_smoothing / (vocab - 2)
    ent_const = label_smoothing * math.log(smoothing_value)   # (V-2)*sv*log(sv)
    if confidence > 0.0:
        ent_const += confidence * math.log(confidence)

    kernel = functools.partial(
        _ls_xent_kernel,
        confidence=float(confidence), smoothing_value=float(smoothing_value),
        ent_const=float(ent_const), ignore_index=int(ignore_index),
        vocab_size=int(vocab), tile_vocab=int(tkv))

    # ---- explicit VMEM limit (below physical, above real need) ------------
    needed = tile_bytes(tm, tkv)
    vmem_limit = int(min(max(needed + (8 << 20), 32 << 20), vmem_budget))
    if vmem_limit < needed + (2 << 20):        # forced-minimum-tile corner case
        vmem_limit = int(min(needed + (2 << 20), vmem_cap - (4 << 20)))

    per_row = pl.pallas_call(
        kernel,
        out_shape=jax.ShapeDtypeStruct((n_rows_pad, 1), jnp.float32),
        grid_spec=pltpu.PrefetchScalarGridSpec(
            num_scalar_prefetch=0,
            grid=(n_row_tiles, n_vocab_tiles),      # vocab (reduction) axis last
            in_specs=[
                pl.BlockSpec((tm, hidden), lambda i, j: (i, 0)),
                pl.BlockSpec((hidden, tkv), lambda i, j: (0, j)),
                pl.BlockSpec((1, tkv), lambda i, j: (0, j)),
                pl.BlockSpec((tm, 1), lambda i, j: (i, 0)),
                pl.BlockSpec((tm, 1), lambda i, j: (i, 0)),
            ],
            out_specs=pl.BlockSpec((tm, 1), lambda i, j: (i, 0)),
            scratch_shapes=[pltpu.VMEM((tm, 4), jnp.float32)],
        ),
        compiler_params=pltpu.CompilerParams(
            dimension_semantics=("parallel", "arbitrary"),
            vmem_limit_bytes=vmem_limit),
    )(x, w, b, tgt, slog)
    return jnp.sum(per_row)      # padded rows contribute exactly zero


# ---------------- LossCompute wrapper (glue) ----------------

def loss_compute_forward(tgt, output, weight, bias, *,
                         label_smoothing, padding_idx, tgt_shift_index=1,
                         trunc_start=0, trunc_size=None,
                         normalization="tokens",
                         tile_rows=1024, tile_vocab=2048):
    """JAX/Pallas equivalent of LossCompute.forward (loss only; no Statistics).

    tgt    : (batch, tgt_len, 1) int          -- batch['tgt']
    output : (batch, trunc_len - shift, hidden) float
    """
    if trunc_size is None:
        trunc_size = tgt.shape[1] - trunc_start
    lo = trunc_start + tgt_shift_index
    hi = trunc_start + trunc_size
    target = tgt[:, lo:hi, :]
    flat_tgt = target[:, :, 0].reshape(-1)

    hidden = output.shape[-1]
    bottled = output.reshape(-1, hidden)

    loss = label_smoothing_loss_sum(
        bottled, weight, bias, flat_tgt,
        label_smoothing=label_smoothing, ignore_index=padding_idx,
        tile_rows=tile_rows, tile_vocab=tile_vocab)

    # Normalization follows the reference module exactly:
    #   normfactor = batch['tgt'][:, :, 0].ne(padding_idx).sum()   ('tokens')
    # i.e. non-pad tokens over the FULL batch['tgt'] tensor (not the shifted
    # target) — this is what the spec's forward() does.
    if normalization == "tokens":
        normfactor = jnp.sum(tgt[:, :, 0] != padding_idx).astype(jnp.float32)
    else:  # 'sents'
        normfactor = jnp.float32(tgt.shape[0])
    # TODO(synk): copy-attn / coverage / alignment / LM-prior branches and the
    # onmt.utils.Statistics object are not implemented (external deps).
    return loss / normfactor


# ---------------- Pure-JAX reference for validation ----------------

def _reference(tgt, output, weight, bias, *, label_smoothing, padding_idx,
               tgt_shift_index=1):
    target = tgt[:, tgt_shift_index:, 0].reshape(-1)
    x = output.reshape(-1, output.shape[-1])
    # Same bf16 matmul / f32 accumulation as the kernel.
    logits = jnp.dot(x.astype(jnp.bfloat16), weight.astype(jnp.bfloat16),
                     preferred_element_type=jnp.float32) + bias.reshape(1, -1)
    lp = jax.nn.log_softmax(logits, axis=-1)
    n, vocab = lp.shape
    sv = label_smoothing / (vocab - 2)
    conf = 1.0 - label_smoothing
    pm = jnp.full((n, vocab), sv, dtype=jnp.float32)
    pm = pm.at[:, padding_idx].set(0.0)
    pm = pm.at[jnp.arange(n), target].set(conf)
    pm = jnp.where((target == padding_idx)[:, None], 0.0, pm)
    safe = jnp.where(pm > 0, pm, 1.0)
    kl = jnp.where(pm > 0, pm * (jnp.log(safe) - lp), 0.0)
    loss = kl.sum()
    norm = jnp.sum(tgt[:, :, 0] != padding_idx).astype(jnp.float32)
    return loss / norm


# ---------------- Demo ----------------

if __name__ == "__main__":
    PAD = 1
    LABEL_SMOOTHING = 0.1
    SHIFT = 1

    key = jax.random.PRNGKey(0)
    k_out, k_w, k_b, k_tgt, k2a, k2b, k2c, k2d = jax.random.split(key, 8)

    # ---- Test 1: tiny forced tiles so every code path is exercised --------
    #   18 bottled rows -> row padding to 24 (3 row tiles of 8),
    #   V=500 -> vocab padded to 512 (4 vocab tiles of 128, -1e30 bias pad).
    B, TGT_LEN, H, V = 2, 10, 128, 500
    output = jax.random.normal(k_out, (B, TGT_LEN - SHIFT, H), dtype=jnp.float32)
    weight = jax.random.normal(k_w, (H, V), dtype=jnp.float32) * 0.05
    bias = jax.random.normal(k_b, (1, V), dtype=jnp.float32) * 0.01
    tgt_ids = jax.random.randint(k_tgt, (B, TGT_LEN), 2, V, dtype=jnp.int32)
    tgt_ids = tgt_ids.at[0, -2:].set(PAD)
    tgt_ids = tgt_ids.at[1, -3:].set(PAD)
    tgt = tgt_ids[:, :, None]

    loss1 = loss_compute_forward(
        tgt, output, weight, bias,
        label_smoothing=LABEL_SMOOTHING, padding_idx=PAD,
        tgt_shift_index=SHIFT, tile_rows=8, tile_vocab=128)
    loss1 = jax.block_until_ready(loss1)
    ref1 = jax.block_until_ready(_reference(
        tgt, output, weight, bias,
        label_smoothing=LABEL_SMOOTHING, padding_idx=PAD,
        tgt_shift_index=SHIFT))
    assert jnp.allclose(loss1, ref1, rtol=2e-4, atol=2e-4), (loss1, ref1)

    # ---- Test 2: default (auto) tiling path --------------------------------
    B2, T2, H2, V2 = 4, 9, 256, 1031
    output2 = jax.random.normal(k2a, (B2, T2 - SHIFT, H2), dtype=jnp.float32)
    weight2 = jax.random.normal(k2b, (H2, V2), dtype=jnp.float32) * 0.05
    bias2 = jax.random.normal(k2c, (1, V2), dtype=jnp.float32) * 0.01
    tgt2_ids = jax.random.randint(k2d, (B2, T2), 2, V2, dtype=jnp.int32)
    tgt2_ids = tgt2_ids.at[0, -3:].set(PAD).at[2, -1:].set(PAD)
    tgt2 = tgt2_ids[:, :, None]

    loss2 = loss_compute_forward(
        tgt2, output2, weight2, bias2,
        label_smoothing=LABEL_SMOOTHING, padding_idx=PAD,
        tgt_shift_index=SHIFT)                  # production defaults, auto tiles
    loss2 = jax.block_until_ready(loss2)
    ref2 = jax.block_until_ready(_reference(
        tgt2, output2, weight2, bias2,
        label_smoothing=LABEL_SMOOTHING, padding_idx=PAD,
        tgt_shift_index=SHIFT))
    assert jnp.allclose(loss2, ref2, rtol=2e-4, atol=2e-4), (loss2, ref2)

    print("KERNEL_OK")
</pallas_src>

<mosaic_0001>
module attributes {stable_mosaic.version = 11 : i64} {
  func.func @_ls_xent_kernel(%arg0: i32, %arg1: i32, %arg2: memref<8x128xbf16, #tpu.memory_space<vmem>>, %arg3: memref<128x128xbf16, #tpu.memory_space<vmem>>, %arg4: memref<1x128xf32, #tpu.memory_space<vmem>>, %arg5: memref<8x1xi32, #tpu.memory_space<vmem>>, %arg6: memref<8x1xf32, #tpu.memory_space<vmem>>, %arg7: memref<8x1xf32, #tpu.memory_space<vmem>>, %arg8: memref<8x4xf32, #tpu.memory_space<vmem>>) attributes {dimension_semantics = [#tpu.dimension_semantics<parallel>, #tpu.dimension_semantics<arbitrary>], iteration_bounds = array<i64: 3, 4>, scalar_prefetch = 0 : i64, scratch_operands = 1 : i64, tpu.core_type = #tpu.core_type<tc>, window_params = [{transform_indices = @transform_0, window_bounds = array<i64: 8, 128>}, {transform_indices = @transform_1, window_bounds = array<i64: 128, 128>}, {transform_indices = @transform_2, window_bounds = array<i64: 1, 128>}, {transform_indices = @transform_3, window_bounds = array<i64: 8, 1>}, {transform_indices = @transform_4, window_bounds = array<i64: 8, 1>}, {transform_indices = @transform_5, window_bounds = array<i64: 8, 1>}]} {
    %c0_i32 = arith.constant 0 : i32
    %0 = arith.cmpi eq, %arg1, %c0_i32 : i32
    %1 = arith.extui %0 : i1 to i32
    %c0_i32_0 = arith.constant 0 : i32
    %2 = arith.cmpi ne, %1, %c0_i32_0 : i32
    scf.if %2 {
      %45 = tpu.iota {dimensions = array<i32: 1>} : vector<8x4xi32>
      %c0_i32_25 = arith.constant 0 : i32
      %46 = vector.broadcast %c0_i32_25 : i32 to vector<8x4xi32>
      %47 = arith.cmpi eq, %45, %46 : vector<8x4xi32>
      %cst_26 = arith.constant -1.000000e+30 : f32
      %cst_27 = arith.constant 0.000000e+00 : f32
      %48 = vector.broadcast %cst_26 : f32 to vector<8x4xf32>
      %49 = vector.broadcast %cst_27 : f32 to vector<8x4xf32>
      %50 = arith.select %47, %48, %49 : vector<8x4xi1>, vector<8x4xf32>
      %c0_28 = arith.constant 0 : index
      %c0_29 = arith.constant 0 : index
      %51 = vector.load %arg8[%c0_28, %c0_29] : memref<8x4xf32, #tpu.memory_space<vmem>>, vector<8x4xf32>
      tpu.vector_store %arg8[%c0_28, %c0_29], %50 {strides = array<i32>} : memref<8x4xf32, #tpu.memory_space<vmem>>, vector<8x4xf32>,
    } else {
    }
    %c0 = arith.constant 0 : index
    %c0_1 = arith.constant 0 : index
    %3 = vector.load %arg2[%c0, %c0_1] : memref<8x128xbf16, #tpu.memory_space<vmem>>, vector<8x128xbf16>
    %c0_2 = arith.constant 0 : index
    %c0_3 = arith.constant 0 : index
    %4 = vector.load %arg3[%c0_2, %c0_3] : memref<128x128xbf16, #tpu.memory_space<vmem>>, vector<128x128xbf16>
    %cst = arith.constant dense<0.000000e+00> : vector<8x128xf32>
    %5 = tpu.matmul %3, %4, %cst {dimension_numbers = #tpu.dot_dimension_numbers<[1], [0], [0], [1], [0, 0, 1, 1], [], []>} : vector<8x128xbf16>, vector<128x128xbf16>, vector<8x128xf32> -> vector<8x128xf32>
    %c0_4 = arith.constant 0 : index
    %c0_5 = arith.constant 0 : index
    %6 = vector.load %arg4[%c0_4, %c0_5] : memref<1x128xf32, #tpu.memory_space<vmem>>, vector<1x128xf32>
    %7 = vector.broadcast %6 : vector<1x128xf32> to vector<8x128xf32>
    %8 = arith.addf %5, %7 : vector<8x128xf32>
    %c0_6 = arith.constant 0 : index
    %c0_7 = arith.constant 0 : index
    %9 = vector.load %arg8[%c0_6, %c0_7] : memref<8x4xf32, #tpu.memory_space<vmem>>, vector<8x1xf32>
    %cst_8 = arith.constant dense<0xFF800000> : vector<8xf32>
    %10 = vector.multi_reduction <maximumf>, %8, %cst_8 [1] : vector<8x128xf32> to vector<8xf32>
    %11 = vector.shape_cast %10 : vector<8xf32> to vector<8x1xf32>
    %12 = arith.maximumf %9, %11 : vector<8x1xf32>
    %c0_9 = arith.constant 0 : index
    %c1 = arith.constant 1 : index
    %13 = vector.load %arg8[%c0_9, %c1] : memref<8x4xf32, #tpu.memory_space<vmem>>, vector<8x1xf32>
    %14 = arith.subf %9, %12 : vector<8x1xf32>
    %15 = math.exp %14 : vector<8x1xf32>
    %16 = arith.mulf %13, %15 : vector<8x1xf32>
    %17 = vector.broadcast %12 : vector<8x1xf32> to vector<8x128xf32>
    %18 = arith.subf %8, %17 : vector<8x128xf32>
    %19 = math.exp %18 : vector<8x128xf32>
    %cst_10 = arith.constant dense<0.000000e+00> : vector<8xf32>
    %20 = vector.multi_reduction <add>, %19, %cst_10 [1] : vector<8x128xf32> to vector<8xf32>
    %21 = vector.shape_cast %20 : vector<8xf32> to vector<8x1xf32>
    %22 = arith.addf %16, %21 : vector<8x1xf32>
    %c0_11 = arith.constant 0 : index
    %c0_12 = arith.constant 0 : index
    %23 = vector.load %arg8[%c0_11, %c0_12] : memref<8x4xf32, #tpu.memory_space<vmem>>, vector<8x1xf32>
    tpu.vector_store %arg8[%c0_11, %c0_12], %12 {strides = array<i32>} : memref<8x4xf32, #tpu.memory_space<vmem>>, vector<8x1xf32>,
    %c0_13 = arith.constant 0 : index
    %c1_14 = arith.constant 1 : index
    %24 = vector.load %arg8[%c0_13, %c1_14] : memref<8x4xf32, #tpu.memory_space<vmem>>, vector<8x1xf32>
    tpu.vector_store %arg8[%c0_13, %c1_14], %22 {strides = array<i32>} : memref<8x4xf32, #tpu.memory_space<vmem>>, vector<8x1xf32>,
    %c128_i32 = arith.constant 128 : i32
    %25 = arith.muli %arg1, %c128_i32 : i32
    %26 = tpu.iota {dimensions = array<i32: 1>} : vector<8x128xi32>
    %27 = vector.broadcast %25 : i32 to vector<8x128xi32>
    %28 = arith.addi %27, %26 : vector<8x128xi32>
    %c0_15 = arith.constant 0 : index
    %c0_16 = arith.constant 0 : index
    %29 = vector.load %arg5[%c0_15, %c0_16] : memref<8x1xi32, #tpu.memory_space<vmem>>, vector<8x1xi32>
    %c0_17 = arith.constant 0 : index
    %c2 = arith.constant 2 : index
    %30 = vector.load %arg8[%c0_17, %c2] : memref<8x4xf32, #tpu.memory_space<vmem>>, vector<8x1xf32>
    %31 = vector.broadcast %29 : vector<8x1xi32> to vector<8x128xi32>
    %32 = arith.cmpi eq, %28, %31 : vector<8x128xi32>
    %cst_18 = arith.constant 0.000000e+00 : f32
    %33 = vector.broadcast %cst_18 : f32 to vector<8x128xf32>
    %34 = arith.select %32, %8, %33 : vector<8x128xi1>, vector<8x128xf32>
    %cst_19 = arith.constant dense<0.000000e+00> : vector<8xf32>
    %35 = vector.multi_reduction <add>, %34, %cst_19 [1] : vector<8x128xf32> to vector<8xf32>
    %36 = vector.shape_cast %35 : vector<8xf32> to vector<8x1xf32>
    %37 = arith.addf %30, %36 : vector<8x1xf32>
    %c0_20 = arith.constant 0 : index
    %c2_21 = arith.constant 2 : index
    %38 = vector.load %arg8[%c0_20, %c2_21] : memref<8x4xf32, #tpu.memory_space<vmem>>, vector<8x1xf32>
    tpu.vector_store %arg8[%c0_20, %c2_21], %37 {strides = array<i32>} : memref<8x4xf32, #tpu.memory_space<vmem>>, vector<8x1xf32>,
    %c0_i32_22 = arith.constant 0 : i32
    %39 = arith.cmpi eq, %arg1, %c0_i32_22 : i32
    %40 = arith.extui %39 : i1 to i32
    %c0_i32_23 = arith.constant 0 : i32
    %41 = arith.cmpi ne, %40, %c0_i32_23 : i32
    scf.if %41 {
      %c0_25 = arith.constant 0 : index
      %c3 = arith.constant 3 : index
      %45 = vector.load %arg8[%c0_25, %c3] : memref<8x4xf32, #tpu.memory_space<vmem>>, vector<8x1xf32>
      %46 = vector.extract_strided_slice %8 {offsets = [0, 1], sizes = [8, 1], strides = [1, 1]} : vector<8x128xf32> to vector<8x1xf32>
      %47 = arith.addf %45, %46 : vector<8x1xf32>
      %c0_26 = arith.constant 0 : index
      %c3_27 = arith.constant 3 : index
      %48 = vector.load %arg8[%c0_26, %c3_27] : memref<8x4xf32, #tpu.memory_space<vmem>>, vector<8x1xf32>
      tpu.vector_store %arg8[%c0_26, %c3_27], %47 {strides = array<i32>} : memref<8x4xf32, #tpu.memory_space<vmem>>, vector<8x1xf32>,
    } else {
    }
    %c3_i32 = arith.constant 3 : i32
    %42 = arith.cmpi eq, %arg1, %c3_i32 : i32
    %43 = arith.extui %42 : i1 to i32
    %c0_i32_24 = arith.constant 0 : i32
    %44 = arith.cmpi ne, %43, %c0_i32_24 : i32
    scf.if %44 {
      %c0_25 = arith.constant 0 : index
      %c0_26 = arith.constant 0 : index
      %45 = vector.load %arg8[%c0_25, %c0_26] : memref<8x4xf32, #tpu.memory_space<vmem>>, vector<8x1xf32>
      %c0_27 = arith.constant 0 : index
      %c1_28 = arith.constant 1 : index
      %46 = vector.load %arg8[%c0_27, %c1_28] : memref<8x4xf32, #tpu.memory_space<vmem>>, vector<8x1xf32>
      %47 = math.log %46 : vector<8x1xf32>
      %48 = arith.addf %45, %47 : vector<8x1xf32>
      %c0_29 = arith.constant 0 : index
      %c2_30 = arith.constant 2 : index
      %49 = vector.load %arg8[%c0_29, %c2_30] : memref<8x4xf32, #tpu.memory_space<vmem>>, vector<8x1xf32>
      %50 = arith.subf %49, %48 : vector<8x1xf32>
      %c0_31 = arith.constant 0 : index
      %c3 = arith.constant 3 : index
      %51 = vector.load %arg8[%c0_31, %c3] : memref<8x4xf32, #tpu.memory_space<vmem>>, vector<8x1xf32>
      %52 = arith.subf %51, %48 : vector<8x1xf32>
      %c0_32 = arith.constant 0 : index
      %c0_33 = arith.constant 0 : index
      %53 = vector.load %arg6[%c0_32, %c0_33] : memref<8x1xf32, #tpu.memory_space<vmem>>, vector<8x1xf32>
      %cst_34 = arith.constant 5.000000e+02 : f32
      %54 = vector.broadcast %cst_34 : f32 to vector<8x1xf32>
      %55 = arith.mulf %54, %48 : vector<8x1xf32>
      %56 = arith.subf %53, %55 : vector<8x1xf32>
      %cst_35 = arith.constant 0.899999976 : f32
      %57 = vector.broadcast %cst_35 : f32 to vector<8x1xf32>
      %58 = arith.mulf %57, %50 : vector<8x1xf32>
      %cst_36 = arith.constant -0.946142971 : f32
      %59 = vector.broadcast %cst_36 : f32 to vector<8x1xf32>
      %60 = arith.subf %59, %58 : vector<8x1xf32>
      %61 = arith.subf %56, %52 : vector<8x1xf32>
      %62 = arith.subf %61, %50 : vector<8x1xf32>
      %cst_37 = arith.constant 2.00803217E-4 : f32
      %63 = vector.broadcast %cst_37 : f32 to vector<8x1xf32>
      %64 = arith.mulf %63, %62 : vector<8x1xf32>
      %65 = arith.subf %60, %64 : vector<8x1xf32>
      %c1_i32 = arith.constant 1 : i32
      %66 = vector.broadcast %c1_i32 : i32 to vector<8x1xi32>
      %67 = arith.cmpi eq, %29, %66 : vector<8x1xi32>
      %cst_38 = arith.constant 0.000000e+00 : f32
      %68 = vector.broadcast %cst_38 : f32 to vector<8x1xf32>
      %69 = arith.select %67, %68, %65 : vector<8x1xi1>, vector<8x1xf32>
      %c0_39 = arith.constant 0 : index
      %c0_40 = arith.constant 0 : index
      %70 = vector.load %arg7[%c0_39, %c0_40] : memref<8x1xf32, #tpu.memory_space<vmem>>, vector<8x1xf32>
      tpu.vector_store %arg7[%c0_39, %c0_40], %69 {strides = array<i32>} : memref<8x1xf32, #tpu.memory_space<vmem>>, vector<8x1xf32>,
    } else {
    }
    return
  }
  func.func @transform_0(%arg0: i32, %arg1: i32) -> (i32, i32) {
    %c0_i32 = arith.constant 0 : i32
    %c0_i32_0 = arith.constant 0 : i32
    return %arg0, %c0_i32 : i32, i32
  }
  func.func @transform_1(%arg0: i32, %arg1: i32) -> (i32, i32) {
    %c0_i32 = arith.constant 0 : i32
    %c0_i32_0 = arith.constant 0 : i32
    return %c0_i32, %arg1 : i32, i32
  }
  func.func @transform_2(%arg0: i32, %arg1: i32) -> (i32, i32) {
    %c0_i32 = arith.constant 0 : i32
    %c0_i32_0 = arith.constant 0 : i32
    return %c0_i32, %arg1 : i32, i32
  }
  func.func @transform_3(%arg0: i32, %arg1: i32) -> (i32, i32) {
    %c0_i32 = arith.constant 0 : i32
    %c0_i32_0 = arith.constant 0 : i32
    return %arg0, %c0_i32 : i32, i32
  }
  func.func @transform_4(%arg0: i32, %arg1: i32) -> (i32, i32) {
    %c0_i32 = arith.constant 0 : i32
    %c0_i32_0 = arith.constant 0 : i32
    return %arg0, %c0_i32 : i32, i32
  }
  func.func @transform_5(%arg0: i32, %arg1: i32) -> (i32, i32) {
    %c0_i32 = arith.constant 0 : i32
    %c0_i32_0 = arith.constant 0 : i32
    return %arg0, %c0_i32 : i32, i32
  }
}

</mosaic_0001>

<llo_original>
// kernel: tpu_custom_call.1
$region0: #{tpu_custom_call.1}
  #allocation0 [shape = 'u32[]', space=smem, size = 0x4, offset = 0x4, fixed_abs, tag = 'smem constant byte address 0x4 - core index']
  #allocation1 [shape = 'u32[144,128]{1,0:T(1,128)}', space=vmem, size = 0x12000, scoped, tag = 'internal scratch']
  #allocation2 [shape = 'f32[8,4]{1,0:T(8,128)}', space=vmem, size = 0x1000, scoped, tag = 'scratch operand']
  %s0 = inlined_call_operand.vmem [shape: bf16[24,128], index: 0, kind: input, shape index: {}]
  %s1 = inlined_call_operand.hbm [shape: bf16[128,512], index: 1, kind: input, shape index: {}]
  %s2 = inlined_call_operand.vmem [shape: f32[1,512], index: 2, kind: input, shape index: {}]
  %s3 = inlined_call_operand.vmem [shape: s32[24,1], index: 3, kind: input, shape index: {}]
  %s4 = inlined_call_operand.vmem [shape: f32[24,1], index: 4, kind: input, shape index: {}]
  %s5 = inlined_call_operand.vmem [shape: f32[24,1], index: 5, kind: output, shape index: {}]
  %s6 = sld [smem:[#allocation0]]
  $region69: #{tpu_custom_call.1} parent=0
    _
  %s8 = ssub.s32 1, %s6
  %s9 = scalar_select 0, %s8, %s6
  $region1: #{tpu_custom_call.1} parent=0
    #allocation3 [shape = 'u8[65536]{0}', space=vmem, size = 0x10000, scoped, tag = 'input window, operand 1']
    #allocation4 [shape = 's32[2]{0}', space=sflag, size = 0x8, scoped, tag = 'scoped memory for tpu_custom_call.1']
    %10 = vsyncpa [#allocation4], 0
    %s11 = scalar_lea.sflag [#allocation4], 1
    %12 = vsyncpa %s11, 0
    loop: start=0, step=1, limit=14
    $region2: #{tpu_custom_call.1} parent=1 // loop_pre_header
      _
    $region3: #{tpu_custom_call.1} parent=1 // loop_header
      %s14 = sphi 0, %s18
      %p15 = scmp.ge.s32.totalorder %s14, 14
      %s21 = sphi 0, %s33
      %s22 = sphi 0, %s29
      %s23 = sphi 0, %s21
      %s24 = sphi 0, %s22
      %s25 = sphi 0, %s23
      %s26 = sphi 0, %s24
      %s36 = sphi 0, %s38
      %s39 = sphi 0, %s36
      %s40 = sphi 0, %s39
      %s56 = sphi 0, %s40
      %s62 = sphi 0, %s64
      %s65 = sphi 0, %s62
      %s66 = sphi 0, %s65
      %s82 = sphi 0, %s66
      %s88 = sphi 0, %s90
      %s91 = sphi 0, %s88
      %s92 = sphi 0, %s91
      %s108 = sphi 0, %s92
      %s114 = sphi 0, %s116
      %s117 = sphi 0, %s114
      %s118 = sphi 0, %s117
      %s134 = sphi 0, %s118
      %s140 = sphi 0, %s142
      %s143 = sphi 0, %s140
      %s144 = sphi 0, %s143
      %s160 = sphi 0, %s144
      %s166 = sphi 0, %s168
      %s169 = sphi 0, %s166
      %s170 = sphi 0, %s169
      %s186 = sphi 0, %s170
    $region4: #{tpu_custom_call.1} parent=1 // loop_header_branch
      %17 = sbr.rel (%p15) target = $region8
    $region5: #{tpu_custom_call.1} parent=1 // loop_body
      %s19 = ssub.s32 %s14, 1
      %s20 = ssub.s32 %s14, 2
      %s27 = sadd.s32 1, %s22
      %p28 = scmp.ge.s32.totalorder %s27, 4
      %s29 = scalar_select %p28, 0, %s27
      %s30 = sadd.s32 1, %s21
      %s31 = scalar_select %p28, %s30, %s21
      %p32 = scmp.ge.s32.totalorder %s31, 3
      %s33 = scalar_select %p32, 0, %s31
      %s34 = ssub.s32 %s21, %s33
      %p35 = scmp.eq.s32.totalorder %s34, 0
      %s37 = sadd.s32 %s36, 1
      %s38 = scalar_select %p35, %s36, %s37
      %p41 = pneg %p35
      %p42 = scmp.eq.s32.totalorder %s14, 11
      %p43 = por %p41, %p42
      %p44 = scmp.ne.s32.totalorder %s36, %s39
      %p45 = scmp.eq.s32.totalorder %s14, 0
      %p46 = por %p44, %p45
      %p47 = scmp.ne.s32.totalorder %s36, %s39
      %p48 = scmp.eq.s32.totalorder %s19, 11
      %p49 = por %p47, %p48
      %p50 = scmp.ne.s32.totalorder %s39, %s40
      %p51 = scmp.eq.s32.totalorder %s19, 0
      %p52 = por %p50, %p51
      %p53 = scmp.ne.s32.totalorder %s39, %s40
      %p54 = scmp.eq.s32.totalorder %s20, 11
      %p55 = por %p53, %p54
      %p57 = scmp.ne.s32.totalorder %s40, %s56
      %p58 = scmp.eq.s32.totalorder %s20, 0
      %p59 = por %p57, %p58
      %s60 = ssub.s32 %s22, %s29
      %p61 = scmp.eq.s32.totalorder %s60, 0
      %s63 = sadd.s32 %s62, 1
      %s64 = scalar_select %p61, %s62, %s63
      %p67 = pneg %p61
      %p68 = scmp.eq.s32.totalorder %s14, 11
      %p69 = por %p67, %p68
      %p70 = scmp.ne.s32.totalorder %s62, %s65
      %p71 = scmp.eq.s32.totalorder %s14, 0
      %p72 = por %p70, %p71
      %p73 = scmp.ne.s32.totalorder %s62, %s65
      %p74 = scmp.eq.s32.totalorder %s19, 11
      %p75 = por %p73, %p74
      %p76 = scmp.ne.s32.totalorder %s65, %s66
      %p77 = scmp.eq.s32.totalorder %s19, 0
      %p78 = por %p76, %p77
      %p79 = scmp.ne.s32.totalorder %s65, %s66
      %p80 = scmp.eq.s32.totalorder %s20, 11
      %p81 = por %p79, %p80
      %p83 = scmp.ne.s32.totalorder %s66, %s82
      %p84 = scmp.eq.s32.totalorder %s20, 0
      %p85 = por %p83, %p84
      %s86 = ssub.s32 %s22, %s29
      %p87 = scmp.eq.s32.totalorder %s86, 0
      %s89 = sadd.s32 %s88, 1
      %s90 = scalar_select %p87, %s88, %s89
      %p93 = pneg %p87
      %p94 = scmp.eq.s32.totalorder %s14, 11
      %p95 = por %p93, %p94
      %p96 = scmp.ne.s32.totalorder %s88, %s91
      %p97 = scmp.eq.s32.totalorder %s14, 0
      %p98 = por %p96, %p97
      %p99 = scmp.ne.s32.totalorder %s88, %s91
      %p100 = scmp.eq.s32.totalorder %s19, 11
      %p101 = por %p99, %p100
      %p102 = scmp.ne.s32.totalorder %s91, %s92
      %p103 = scmp.eq.s32.totalorder %s19, 0
      %p104 = por %p102, %p103
      %p105 = scmp.ne.s32.totalorder %s91, %s92
      %p106 = scmp.eq.s32.totalorder %s20, 11
      %p107 = por %p105, %p106
      %p109 = scmp.ne.s32.totalorder %s92, %s108
      %p110 = scmp.eq.s32.totalorder %s20, 0
      %p111 = por %p109, %p110
      %s112 = ssub.s32 %s21, %s33
      %p113 = scmp.eq.s32.totalorder %s112, 0
      %s115 = sadd.s32 %s114, 1
      %s116 = scalar_select %p113, %s114, %s115
      %p119 = pneg %p113
      %p120 = scmp.eq.s32.totalorder %s14, 11
      %p121 = por %p119, %p120
      %p122 = scmp.ne.s32.totalorder %s114, %s117
      %p123 = scmp.eq.s32.totalorder %s14, 0
      %p124 = por %p122, %p123
      %p125 = scmp.ne.s32.totalorder %s114, %s117
      %p126 = scmp.eq.s32.totalorder %s19, 11
      %p127 = por %p125, %p126
      %p128 = scmp.ne.s32.totalorder %s117, %s118
      %p129 = scmp.eq.s32.totalorder %s19, 0
      %p130 = por %p128, %p129
      %p131 = scmp.ne.s32.totalorder %s117, %s118
      %p132 = scmp.eq.s32.totalorder %s20, 11
      %p133 = por %p131, %p132
      %p135 = scmp.ne.s32.totalorder %s118, %s134
      %p136 = scmp.eq.s32.totalorder %s20, 0
      %p137 = por %p135, %p136
      %s138 = ssub.s32 %s21, %s33
      %p139 = scmp.eq.s32.totalorder %s138, 0
      %s141 = sadd.s32 %s140, 1
      %s142 = scalar_select %p139, %s140, %s141
      %p145 = pneg %p139
      %p146 = scmp.eq.s32.totalorder %s14, 11
      %p147 = por %p145, %p146
      %p148 = scmp.ne.s32.totalorder %s140, %s143
      %p149 = scmp.eq.s32.totalorder %s14, 0
      %p150 = por %p148, %p149
      %p151 = scmp.ne.s32.totalorder %s140, %s143
      %p152 = scmp.eq.s32.totalorder %s19, 11
      %p153 = por %p151, %p152
      %p154 = scmp.ne.s32.totalorder %s143, %s144
      %p155 = scmp.eq.s32.totalorder %s19, 0
      %p156 = por %p154, %p155
      %p157 = scmp.ne.s32.totalorder %s143, %s144
      %p158 = scmp.eq.s32.totalorder %s20, 11
      %p159 = por %p157, %p158
      %p161 = scmp.ne.s32.totalorder %s144, %s160
      %p162 = scmp.eq.s32.totalorder %s20, 0
      %p163 = por %p161, %p162
      %s164 = ssub.s32 %s21, %s33
      %p165 = scmp.eq.s32.totalorder %s164, 0
      %s167 = sadd.s32 %s166, 1
      %s168 = scalar_select %p165, %s166, %s167
      %p171 = pneg %p165
      %p172 = scmp.eq.s32.totalorder %s14, 11
      %p173 = por %p171, %p172
      %p174 = scmp.ne.s32.totalorder %s166, %s169
      %p175 = scmp.eq.s32.totalorder %s14, 0
      %p176 = por %p174, %p175
      %p177 = scmp.ne.s32.totalorder %s166, %s169
      %p178 = scmp.eq.s32.totalorder %s19, 11
      %p179 = por %p177, %p178
      %p180 = scmp.ne.s32.totalorder %s169, %s170
      %p181 = scmp.eq.s32.totalorder %s19, 0
      %p182 = por %p180, %p181
      %p183 = scmp.ne.s32.totalorder %s169, %s170
      %p184 = scmp.eq.s32.totalorder %s20, 11
      %p185 = por %p183, %p184
      %p187 = scmp.ne.s32.totalorder %s170, %s186
      %p188 = scmp.eq.s32.totalorder %s20, 0
      %p189 = por %p187, %p188
      %p190 = scmp.le.s32.totalorder 1, %s14
      %p191 = scmp.lt.s32.totalorder %s14, 13
      %p192 = pnand %p190, %p191
      %p193 = pneg %p192
      // Predicated region
      $region9: #{tpu_custom_call.1} parent=5 // pred_check
        _
      $region10: #{tpu_custom_call.1} parent=5 // pred_check_branch
        %195 = sbr.rel (%p192) target = $region12
      $region11: #{tpu_custom_call.1} parent=5 // pred_region
        %s196 = ssub.s32 %s14, 1
      $region12: #{tpu_custom_call.1} parent=5 // pred_fallthru
        _
      %p197 = scmp.lt.s32.totalorder %s14, 12
      // Predicated region
      $region13: #{tpu_custom_call.1} parent=5 // pred_check
        %p198 = pneg %p197
      $region14: #{tpu_custom_call.1} parent=5 // pred_check_branch
        %200 = sbr.rel (%p198) target = $region16
      $region15: #{tpu_custom_call.1} parent=5 // pred_region
        // Predicated region
        $region17: #{tpu_custom_call.1} parent=15 // pred_check
          %p201 = pneg %p46
        $region18: #{tpu_custom_call.1} parent=15 // pred_check_branch
          %203 = sbr.rel (%p201) target = $region20
        $region19: #{tpu_custom_call.1} parent=15 // pred_region
          %p204 = scmp.lt.s32.totalorder %s21, 2
          %s205 = scalar_select %p204, %s21, 2
          %s206 = smul.addr %s205, 4
          %s207 = scalar_lea.vmem %s0, %s206
        $region20: #{tpu_custom_call.1} parent=15 // pred_fallthru
          _
        // Predicated region
        $region21: #{tpu_custom_call.1} parent=15 // pred_check
          %p208 = pneg %p72
        $region22: #{tpu_custom_call.1} parent=15 // pred_check_branch
          %210 = sbr.rel (%p208) target = $region24
        $region23: #{tpu_custom_call.1} parent=15 // pred_region
          %s211 = sand.u32 %s62, 1
          %s212 = scalar_lea.sflag [#allocation4], %s211
          %s213 = sand.u32 %s62, 1
          %s214 = smul.addr %s213, 64
          %s215 = scalar_lea.vmem [#allocation3], %s214
          %s217 = ssub.s32 1024, 1024
          %218 = vsyncadd %s212, %s217
          %s219 = smul.addr %s22, 64
          %s220 = scalar_lea.hbm %s1, %s219
          %s221 = sshll.u32 %s215, 4
          %s222 = int_to_ptr.vmem [resolvable:$true] %s221
          %227 = dma.hbm_to_vmem [thread:$0]  %s220, 1024, %s222, %s212, 256, 64, 4
        $region24: #{tpu_custom_call.1} parent=15 // pred_fallthru
          _
        // Predicated region
        $region25: #{tpu_custom_call.1} parent=15 // pred_check
          %p228 = pneg %p98
        $region26: #{tpu_custom_call.1} parent=15 // pred_check_branch
          %230 = sbr.rel (%p228) target = $region28
        $region27: #{tpu_custom_call.1} parent=15 // pred_region
          %p231 = scmp.lt.s32.totalorder %s22, 3
          %s232 = scalar_select %p231, %s22, 3
          %s233 = scalar_lea.vmem %s2, %s232
        $region28: #{tpu_custom_call.1} parent=15 // pred_fallthru
          _
        // Predicated region
        $region29: #{tpu_custom_call.1} parent=15 // pred_check
          %p234 = pneg %p124
        $region30: #{tpu_custom_call.1} parent=15 // pred_check_branch
          %236 = sbr.rel (%p234) target = $region32
        $region31: #{tpu_custom_call.1} parent=15 // pred_region
          %p237 = scmp.lt.s32.totalorder %s21, 2
          %s238 = scalar_select %p237, %s21, 2
          %s239 = smul.addr %s238, 8
          %s240 = scalar_lea.vmem %s3, %s239
        $region32: #{tpu_custom_call.1} parent=15 // pred_fallthru
          _
        // Predicated region
        $region33: #{tpu_custom_call.1} parent=15 // pred_check
          %p241 = pneg %p150
        $region34: #{tpu_custom_call.1} parent=15 // pred_check_branch
          %243 = sbr.rel (%p241) target = $region36
        $region35: #{tpu_custom_call.1} parent=15 // pred_region
          %p244 = scmp.lt.s32.totalorder %s21, 2
          %s245 = scalar_select %p244, %s21, 2
          %s246 = smul.addr %s245, 8
          %s247 = scalar_lea.vmem %s4, %s246
        $region36: #{tpu_custom_call.1} parent=15 // pred_fallthru
          _
      $region16: #{tpu_custom_call.1} parent=5 // pred_fallthru
        _
      %p248 = scmp.le.s32.totalorder 1, %s14
      %p249 = scmp.lt.s32.totalorder %s14, 13
      %p250 = pnand %p248, %p249
      %p251 = pneg %p250
      // Predicated region
      $region37: #{tpu_custom_call.1} parent=5 // pred_check
        _
      $region38: #{tpu_custom_call.1} parent=5 // pred_check_branch
        %253 = sbr.rel (%p250) target = $region40
      $region39: #{tpu_custom_call.1} parent=5 // pred_region
        %s254 = ssub.s32 %s14, 1
        %s255 = sand.u32 %s65, 1
        %s256 = scalar_lea.sflag [#allocation4], %s255
        %s257 = sand.u32 %s65, 1
        %s258 = smul.addr %s257, 64
        %s259 = scalar_lea.vmem [#allocation3], %s258
        // Predicated region
        $region41: #{tpu_custom_call.1} parent=39 // pred_check
          %p260 = pneg %p78
        $region42: #{tpu_custom_call.1} parent=39 // pred_check_branch
          %262 = sbr.rel (%p260) target = $region44
        $region43: #{tpu_custom_call.1} parent=39 // pred_region
          %263 = dma.done %s256, 1024
        $region44: #{tpu_custom_call.1} parent=39 // pred_fallthru
          _
        %p264 = scmp.lt.s32.totalorder %s23, 2
        %s265 = scalar_select %p264, %s23, 2
        %s266 = smul.addr %s265, 4
        %s267 = scalar_lea.vmem %s0, %s266
        %p268 = pneg %p52
        %p269 = pneg %p49
        %s270 = sand.u32 %s65, 1
        %s271 = scalar_lea.sflag [#allocation4], %s270
        %s272 = sand.u32 %s65, 1
        %s273 = smul.addr %s272, 64
        %s274 = scalar_lea.vmem [#allocation3], %s273
        %p275 = pneg %p78
        %p276 = pneg %p75
        %p277 = scmp.lt.s32.totalorder %s24, 3
        %s278 = scalar_select %p277, %s24, 3
        %s279 = scalar_lea.vmem %s2, %s278
        %p280 = pneg %p104
        %p281 = pneg %p101
        %p282 = scmp.lt.s32.totalorder %s23, 2
        %s283 = scalar_select %p282, %s23, 2
        %s284 = smul.addr %s283, 8
        %s285 = scalar_lea.vmem %s3, %s284
        %p286 = pneg %p130
        %p287 = pneg %p127
        %p288 = scmp.lt.s32.totalorder %s23, 2
        %s289 = scalar_select %p288, %s23, 2
        %s290 = smul.addr %s289, 8
        %s291 = scalar_lea.vmem %s4, %s290
        %p292 = pneg %p156
        %p293 = pneg %p153
        %p294 = pneg %p182
        %p295 = pneg %p179
        %p296 = scmp.lt.s32.totalorder %s23, 2
        %s297 = scalar_select %p296, %s23, 2
        %s298 = smul.addr %s297, 8
        %s299 = scalar_lea.vmem %s5, %s298
        %p300 = scmp.lt.s32.totalorder %s23, 2
        %s301 = scalar_select %p300, %s23, 2
        %s302 = smul.addr %s301, 4
        %s303 = scalar_lea.vmem %s0, %s302
        %p304 = scmp.lt.s32.totalorder %s24, 3
        %s305 = scalar_select %p304, %s24, 3
        %s306 = scalar_lea.vmem %s2, %s305
        %p307 = scmp.lt.s32.totalorder %s23, 2
        %s308 = scalar_select %p307, %s23, 2
        %s309 = smul.addr %s308, 8
        %s310 = scalar_lea.vmem %s3, %s309
        %p311 = scmp.lt.s32.totalorder %s23, 2
        %s312 = scalar_select %p311, %s23, 2
        %s313 = smul.addr %s312, 8
        %s314 = scalar_lea.vmem %s4, %s313
        %p315 = scmp.lt.s32.totalorder %s23, 2
        %s316 = scalar_select %p315, %s23, 2
        %s317 = smul.addr %s316, 8
        %s318 = scalar_lea.vmem %s5, %s317
        %p320 = scmp.eq.s32.totalorder %s24, 0
        // Predicated region
        $region45: #{tpu_custom_call.1} parent=39 // pred_check
          %p321 = pneg %p320
        $region46: #{tpu_custom_call.1} parent=39 // pred_check_branch
          %323 = sbr.rel (%p321) target = $region48
        $region47: #{tpu_custom_call.1} parent=39 // pred_region
          %v324 = vlaneseq
          %v325 = vand.u32 %v324, 127
          %vm326 = vcmp.eq.s32.totalorder %v325, 0
          %v327 = vsel %vm326, -1e+30, 0.0
          %vm328 = vcmask 31744
          %329 = vst.msk [vmem:[#allocation2] sm:$0xff] %vm328, %v327
        $region48: #{tpu_custom_call.1} parent=39 // pred_fallthru
          _
        %v330 = vld [vmem:[%s303] sm:$0xf]
        %v331 = vld [vmem:[%s259] sm:$0xf]
        %v332 = vld [vmem:[%s259 + $0x4] sm:$0xf]
        %v333 = vld [vmem:[%s259 + $0x8] sm:$0xf]
        %v334 = vld [vmem:[%s259 + $0xc] sm:$0xf]
        %v335 = vld [vmem:[%s259 + $0x10] sm:$0xf]
        %v336 = vld [vmem:[%s259 + $0x14] sm:$0xf]
        %v337 = vld [vmem:[%s259 + $0x18] sm:$0xf]
        %v338 = vld [vmem:[%s259 + $0x1c] sm:$0xf]
        %v339 = vld [vmem:[%s259 + $0x20] sm:$0xf]
        %v340 = vld [vmem:[%s259 + $0x24] sm:$0xf]
        %v341 = vld [vmem:[%s259 + $0x28] sm:$0xf]
        %v342 = vld [vmem:[%s259 + $0x2c] sm:$0xf]
        %v343 = vld [vmem:[%s259 + $0x30] sm:$0xf]
        %v344 = vld [vmem:[%s259 + $0x34] sm:$0xf]
        %v345 = vld [vmem:[%s259 + $0x38] sm:$0xf]
        %v346 = vld [vmem:[%s259 + $0x3c] sm:$0xf]
        %v347 = vld [vmem:[%s306] sm:$0x1]
        %v349 = vlaneseq
        %v350 = vshrl.u32 %v349, 7
        %v351 = vsub.s32 0, %v350
        %v352 = vrot.slane %v347, %v351
        %v370 = vunpack.c.l.b16 %v331
        %v371 = vunpack.c.l.b16 %v332
        %v372 = vunpack.c.l.b16 %v333
        %v373 = vunpack.c.l.b16 %v334
        %v374 = vunpack.c.l.b16 %v335
        %v375 = vunpack.c.l.b16 %v336
        %v376 = vunpack.c.l.b16 %v337
        %v377 = vunpack.c.l.b16 %v338
        %v378 = vunpack.c.l.b16 %v339
        %v379 = vunpack.c.l.b16 %v340
        %v380 = vunpack.c.l.b16 %v341
        %v381 = vunpack.c.l.b16 %v342
        %v382 = vunpack.c.l.b16 %v343
        %v383 = vunpack.c.l.b16 %v344
        %v384 = vunpack.c.l.b16 %v345
        %v385 = vunpack.c.l.b16 %v346
        %v386 = vpack.c.b16 %v371, %v370
        %v387 = vpack.c.b16 %v373, %v372
        %v388 = vpack.c.b16 %v375, %v374
        %v389 = vpack.c.b16 %v377, %v376
        %v390 = vpack.c.b16 %v379, %v378
        %v391 = vpack.c.b16 %v381, %v380
        %v392 = vpack.c.b16 %v383, %v382
        %v393 = vpack.c.b16 %v385, %v384
        %402 = vmatprep.subr.bf16.mxu0 0
        %403 = vmatpush1.bf16.msra.mxu0 %v386
        %404 = vmatprep.subr.bf16.mxu0 0
        %405 = vmatpush1.bf16.msra.mxu0 %v387
        %406 = vmatprep.subr.bf16.mxu0 0
        %407 = vmatpush1.bf16.msra.mxu0 %v388
        %408 = vmatprep.subr.bf16.mxu0 0
        %409 = vmatpush1.bf16.msra.mxu0 %v389
        %410 = vmatprep.subr.bf16.mxu0 0
        %411 = vmatpush1.bf16.msra.mxu0 %v390
        %412 = vmatprep.subr.bf16.mxu0 0
        %413 = vmatpush1.bf16.msra.mxu0 %v391
        %414 = vmatprep.subr.bf16.mxu0 0
        %415 = vmatpush1.bf16.msra.mxu0 %v392
        %416 = vmatprep.subr.bf16.mxu0 0
        %417 = vmatpush1.bf16.msra.mxu0 %v393
        %418 = vmatprep.subr.bf16.mxu0 0
        %419 = vmatpush1.bf16.msra.mxu0 0
        %420 = vmatprep.subr.bf16.mxu0 0
        %421 = vmatpush1.bf16.msra.mxu0 0
        %422 = vmatprep.subr.bf16.mxu0 0
        %423 = vmatpush1.bf16.msra.mxu0 0
        %424 = vmatprep.subr.bf16.mxu0 0
        %425 = vmatpush1.bf16.msra.mxu0 0
        %426 = vmatprep.subr.bf16.mxu0 0
        %427 = vmatpush1.bf16.msra.mxu0 0
        %428 = vmatprep.subr.bf16.mxu0 0
        %429 = vmatpush1.bf16.msra.mxu0 0
        %430 = vmatprep.subr.bf16.mxu0 0
        %431 = vmatpush1.bf16.msra.mxu0 0
        %432 = vmatprep.subr.bf16.mxu0 0
        %433 = vmatpush1.bf16.msra.mxu0 0
        %434 = vmatprep.mubr.bf16.mxu0 0
        %435 = vmatmul.mubr.bf16.gmra.mrb[0].mxu0 %v330
        %v436 = vpop.f32.mrb[0].mxu0
        %v437 = vadd.f32 %v352, %v436
        %v438 = vpop.f32.mrb[0].mxu0
        %v439 = vpop.f32.mrb[0].mxu0
        %v440 = vpop.f32.mrb[0].mxu0
        %441 = vdwg.mxu0
        %v442 = vld [vmem:[#allocation2] sm:$0xff]
        %443 = vmax.xlane.f32.xlu0 %v437
        %v444 = vpop.xlane.xlu0 %443
        %v445 = vmax.f32 %v442, %v444
        %v446 = vsub.f32 %v442, %v445
        %v447 = vmul.f32 %v446, 1.442695
        %v448 = vpow.pop %v447
        %450 = vrot.lane.b32.xlu0 %v448, 1
        %v451 = vpop.permute.xlu0 %450
        %v453 = vmul.f32 %v442, %v451
        %455 = vset.pattern.permute.xlu0 0
        %456 = vperm.xlu0 %455, %v445
        %v457 = vpop.permute.xlu0 %456
        %v459 = vsub.f32 %v437, %v457
        %v460 = vmul.f32 %v459, 1.442695
        %v461 = vpow.pop %v460
        %462 = vadd.xlane.f32.xlu0 %v461
        %v463 = vpop.xlane.xlu0 %462
        %v464 = vadd.f32 %v453, %v463
        %vm465 = vcmask 7168
        %466 = vst.msk [vmem:[#allocation2] sm:$0xff] %vm465, %v445
        %vm467 = vcmask 15368
        %468 = vst.msk [vmem:[#allocation2] sm:$0xff] %vm467, %v464
        %s469 = smul.u32 %s24, 128
        %v470 = vlaneseq
        %v471 = vand.u32 %v470, 127
        %v472 = vstv %s469
        %v473 = vadd.s32 %v472, %v471
        %v474 = vld [vmem:[%s310] sm:$0xff]
        %v475 = vld [vmem:[#allocation2] sm:$0xff]
        %476 = vset.pattern.permute.xlu0 0
        %477 = vperm.xlu0 %476, %v474
        %v478 = vpop.permute.xlu0 %477
        %vm479 = vcmp.eq.s32.totalorder %v473, %v478
        %v480 = vsel %vm479, %v437, 0.0
        %481 = vadd.xlane.f32.xlu0 %v480
        %v482 = vpop.xlane.xlu0 %481
        %v483 = vadd.f32 %v475, %v482
        %vm484 = vcmask 23568
        %485 = vst.msk [vmem:[#allocation2] sm:$0xff] %vm484, %v483
        // Predicated region
        $region49: #{tpu_custom_call.1} parent=39 // pred_check
          %p486 = pneg %p320
        $region50: #{tpu_custom_call.1} parent=39 // pred_check_branch
          %488 = sbr.rel (%p486) target = $region52
        $region51: #{tpu_custom_call.1} parent=39 // pred_region
          %v489 = vld [vmem:[#allocation2] sm:$0xff]
          %491 = vrot.lane.b32.xlu0 %v437, 2
          %v492 = vpop.permute.xlu0 %491
          %v494 = vadd.f32 %v489, %v492
          %vm495 = vcmask 31768
          %496 = vst.msk [vmem:[#allocation2] sm:$0xff] %vm495, %v494
        $region52: #{tpu_custom_call.1} parent=39 // pred_fallthru
          _
        %p497 = scmp.eq.s32.totalorder %s24, 3
        // Predicated region
        $region53: #{tpu_custom_call.1} parent=39 // pred_check
          %p498 = pneg %p497
        $region54: #{tpu_custom_call.1} parent=39 // pred_check_branch
          %500 = sbr.rel (%p498) target = $region56
        $region55: #{tpu_custom_call.1} parent=39 // pred_region
          %v501 = vld [vmem:[#allocation2] sm:$0xff]
          %v502 = vlog2.pop %v501
          %v503 = vmul.f32 %v502, 0.6931472
          %505 = vrot.lane.b32.xlu0 %v503, 127
          %v506 = vpop.permute.xlu0 %505
          %v508 = vadd.f32 %v501, %v506
          %510 = vrot.lane.b32.xlu0 %v508, 2
          %v511 = vpop.permute.xlu0 %510
          %v513 = vsub.f32 %v501, %v511
          %514 = vrot.lane.b32.xlu0 %v508, 3
          %v515 = vpop.permute.xlu0 %514
          %v517 = vsub.f32 %v501, %v515
          %v518 = vld [vmem:[%s314] sm:$0xff]
          %v519 = vmul.f32 %v508, 500.0
          %v520 = vsub.f32 %v518, %v519
          %v521 = vmul.f32 %v513, 0.9
          %v522 = vsub.f32 -0.946143, %v521
          %524 = vrot.lane.b32.xlu0 %v517, 125
          %v525 = vpop.permute.xlu0 %524
          %v527 = vsub.f32 %v520, %v525
          %529 = vrot.lane.b32.xlu0 %v513, 126
          %v530 = vpop.permute.xlu0 %529
          %v532 = vsub.f32 %v527, %v530
          %v533 = vmul.f32 %v532, 0.00020080322
          %535 = vrot.lane.b32.xlu0 %v533, 2
          %v536 = vpop.permute.xlu0 %535
          %v538 = vsub.f32 %v522, %v536
          %vm539 = vcmp.eq.s32.totalorder %v474, 1
          %541 = vrot.lane.b32.xlu0 %v538, 126
          %v542 = vpop.permute.xlu0 %541
          %v544 = vsel %vm539, 0.0, %v542
          %545 = vst.msk [vmem:[%s318] sm:$0xff] %vm465, %v544
        $region56: #{tpu_custom_call.1} parent=39 // pred_fallthru
          _
        %p546 = scmp.lt.s32.totalorder %s23, 2
        %s547 = scalar_select %p546, %s23, 2
        %s548 = smul.addr %s547, 8
        %s549 = scalar_lea.vmem %s5, %s548
        // Predicated region
        $region57: #{tpu_custom_call.1} parent=39 // pred_check
          %p550 = pneg %p179
        $region58: #{tpu_custom_call.1} parent=39 // pred_check_branch
          %552 = sbr.rel (%p550) target = $region60
        $region59: #{tpu_custom_call.1} parent=39 // pred_region
          _
        $region60: #{tpu_custom_call.1} parent=39 // pred_fallthru
          _
      $region40: #{tpu_custom_call.1} parent=5 // pred_fallthru
        _
      %p553 = scmp.le.s32.totalorder 2, %s14
      // Predicated region
      $region61: #{tpu_custom_call.1} parent=5 // pred_check
        %p554 = pneg %p553
      $region62: #{tpu_custom_call.1} parent=5 // pred_check_branch
        %556 = sbr.rel (%p554) target = $region64
      $region63: #{tpu_custom_call.1} parent=5 // pred_region
        %s557 = ssub.s32 %s14, 2
        // Predicated region
        $region65: #{tpu_custom_call.1} parent=63 // pred_check
          %p558 = pneg %p185
        $region66: #{tpu_custom_call.1} parent=63 // pred_check_branch
          %560 = sbr.rel (%p558) target = $region68
        $region67: #{tpu_custom_call.1} parent=63 // pred_region
          %p561 = scmp.lt.s32.totalorder %s25, 2
          %s562 = scalar_select %p561, %s25, 2
          %s563 = smul.addr %s562, 8
          %s564 = scalar_lea.vmem %s5, %s563
        $region68: #{tpu_custom_call.1} parent=63 // pred_fallthru
          _
      $region64: #{tpu_custom_call.1} parent=5 // pred_fallthru
        _
    $region6: #{tpu_custom_call.1} parent=1 // loop_footer
      %s18 = sadd.s32 1, %s14
    $region7: #{tpu_custom_call.1} parent=1 // loop_footer_branch
      %13 = sbr.rel target = $region3
    $region8: #{tpu_custom_call.1} parent=1 // loop_exit
      _
    %565 = vsyncpa [#allocation4], 1
    %s566 = scalar_lea.sflag [#allocation4], 1
    %567 = vsyncpa %s566, 1

</llo_original>
